<compile_context>
chip_gen: v6e
topology: v6e:2x2x1
jax: 0.10.0
libtpu: 0.0.40
codegen_flags: <defaults>
</compile_context>

<pallas_src>
import functools

import jax
import jax.numpy as jnp
from jax import lax
from jax.experimental import pallas as pl
from jax.experimental.pallas import tpu as pltpu


def _mlp_kernel(n_layers, bias_offsets, out_dims, x_ref, *refs):
    """refs = (w0, w1, ..., w_{L-1}, bias_pack_ref, out_ref).

    x_ref:  (block_m, in_dim)           -- native layout, contiguous HBM tile
    w_i:    (out_i, in_i)               -- native torch Linear layout
    bias:   (sum(out_i padded to 8), 1) -- column vector, broadcasts over lanes
    out:    (out_dim, block_m)          -- lane-dense store
    """
    w_refs = refs[:n_layers]
    bias_ref = refs[n_layers]
    out_ref = refs[n_layers + 1]

    h = None
    for i in range(n_layers):
        w = w_refs[i][...]                              # (out_i, in_i)
        off = bias_offsets[i]
        b = bias_ref[off:off + out_dims[i], :]          # (out_i, 1), static 8-aligned slice
        if i == 0:
            # Contract both last dims: (out0, in).(block_m, in) -> (out0, block_m).
            # Keeps x in its native HBM layout while producing batch-on-lanes
            # activations for the rest of the net.
            h = lax.dot_general(
                w, x_ref[...],
                dimension_numbers=(((1,), (1,)), ((), ())),
                preferred_element_type=jnp.float32) + b
        else:
            # (out_i, in_i) @ (in_i, block_m) -> (out_i, block_m)
            h = jnp.dot(w, h, preferred_element_type=jnp.float32) + b
        if i < n_layers - 1:  # Tanh after every layer except the last (matches DNN)
            h = jnp.tanh(h)
    out_ref[...] = h.astype(out_ref.dtype)


def pack_biases(biases):
    """Pack all biases into one resident column (hoisted out of the call path).

    Each segment is padded to a multiple of 8 rows so in-kernel static sublane
    slices stay aligned. Call once; reuse the result every forward call.
    """
    offsets, segments, off = [], [], 0
    for b in biases:
        offsets.append(off)
        pad = (-b.shape[0]) % 8
        segments.append(jnp.pad(b, (0, pad)))
        off += b.shape[0] + pad
    bias_pack = jnp.concatenate(segments).reshape(-1, 1)  # (sum_padded, 1)
    return bias_pack, tuple(offsets)


def _choose_block_m(batch, cap, num_tc):
    """Batch-/generation-aware tile size along the lane (batch) axis.

    Single grid step when the batch fits under the vreg-pressure cap
    (h is (32, block_m) f32 -> 4*(block_m/128) vregs, so cap<=1024);
    otherwise balanced 128-aligned tiles, grown in multiples of `num_tc`
    tiles so multi-TensorCore chips (v7x: num_tc=2) get equal work.
    """
    if batch <= cap:
        return batch                        # full-extent block, one grid step
    n_tiles = max(1, num_tc)
    while -(-batch // n_tiles) > cap:       # ceil-div
        n_tiles += max(1, num_tc)
    tile = -(-batch // n_tiles)
    return ((tile + 127) // 128) * 128      # lane-aligned (last dim of out block)


def dnn_forward(x, weights, bias_pack, *, bias_offsets, block_m_cap=512, num_tc=1):
    """Pallas forward pass of the PyTorch `DNN` MLP.

    x:          (B, layers[0]) float32, native layout.
    weights:    list of (layers[i+1], layers[i]) arrays (native torch layout).
    bias_pack:  (sum_padded, 1) column from `pack_biases`.
    Returns (B, layers[-1]).
    """
    n_layers = len(weights)
    B, in_dim = x.shape
    out_dim = weights[-1].shape[0]
    out_dims = tuple(int(w.shape[0]) for w in weights)

    block_m = _choose_block_m(B, block_m_cap, num_tc)
    grid = (pl.cdiv(B, block_m),)

    # x streams in native layout; the block covers the whole last dim so each
    # tile is a fully contiguous HBM read (no wrapper transpose needed).
    in_specs = [pl.BlockSpec((block_m, in_dim), lambda i: (i, 0))]
    for w in weights:
        # Whole weight resident across the grid (constant index map -> no
        # re-fetch after step 0). pipeline_mode=pl.Buffered(1) would also drop
        # the second buffer, but the resident footprint is only tens of KB so
        # it is intentionally left at the default for compile robustness.
        in_specs.append(pl.BlockSpec(w.shape, lambda i: (0, 0)))
    in_specs.append(pl.BlockSpec(bias_pack.shape, lambda i: (0, 0)))

    out_spec = pl.BlockSpec((out_dim, block_m), lambda i: (0, i))

    kernel = functools.partial(_mlp_kernel, n_layers, bias_offsets, out_dims)

    out_t = pl.pallas_call(
        kernel,
        out_shape=jax.ShapeDtypeStruct((out_dim, B), x.dtype),
        grid=grid,
        in_specs=in_specs,
        out_specs=out_spec,
        compiler_params=pltpu.CompilerParams(
            dimension_semantics=("parallel",)),  # batch tiles shard across TCs (v7x)
    )(x, *weights, bias_pack)

    # (out_dim, B) -> (B, out_dim). out_dim == 1 in the PINN config, so this is
    # a free contiguous reshape, not an HBM transpose.
    return out_t.T


def init_params(layers, key):
    """Deterministic init mimicking torch.nn.Linear (uniform +/- 1/sqrt(fan_in)).

    Weights are kept in native torch layout (fan_out, fan_in).
    """
    weights, biases = [], []
    for i in range(len(layers) - 1):
        fan_in, fan_out = layers[i], layers[i + 1]
        key, kw, kb = jax.random.split(key, 3)
        bound = 1.0 / float(fan_in) ** 0.5
        w = jax.random.uniform(kw, (fan_out, fan_in), jnp.float32, -bound, bound)
        b = jax.random.uniform(kb, (fan_out,), jnp.float32, -bound, bound)
        weights.append(w)
        biases.append(b)
    return weights, biases


def dnn_forward_ref(x, weights, biases):
    """Pure-JAX reference (y = x W^T + b per layer, tanh in between)."""
    h = x
    n = len(weights)
    for i, (w, b) in enumerate(zip(weights, biases)):
        h = h @ w.T + b
        if i < n - 1:
            h = jnp.tanh(h)
    return h


if __name__ == "__main__":
    # Typical PINN-inverse config: input (x, t) -> hidden 32 x 3 -> scalar output.
    layers = [2, 32, 32, 32, 1]
    batch = 256  # <= block_m_cap -> whole batch in a single grid step

    key = jax.random.PRNGKey(0)
    key, kx = jax.random.split(key)
    x = jax.random.normal(kx, (batch, layers[0]), jnp.float32)

    weights, biases = init_params(layers, key)

    # Bias packing hoisted out of the per-call path: done exactly once.
    bias_pack, bias_offsets = pack_biases(biases)

    fwd = jax.jit(functools.partial(
        dnn_forward, bias_offsets=bias_offsets, block_m_cap=512, num_tc=1))

    out = fwd(x, weights, bias_pack)
    out = jax.block_until_ready(out)

    ref = dnn_forward_ref(x, weights, biases)
    assert out.shape == (batch, layers[-1])
    assert jnp.allclose(out, ref, atol=1e-5, rtol=1e-5)
    print("KERNEL_OK")
</pallas_src>

<mosaic_0001>
module attributes {stable_mosaic.version = 11 : i64} {
  func.func @_mlp_kernel(%arg0: i32, %arg1: memref<256x2xf32, #tpu.memory_space<vmem>>, %arg2: memref<32x2xf32, #tpu.memory_space<vmem>>, %arg3: memref<32x32xf32, #tpu.memory_space<vmem>>, %arg4: memref<32x32xf32, #tpu.memory_space<vmem>>, %arg5: memref<1x32xf32, #tpu.memory_space<vmem>>, %arg6: memref<104x1xf32, #tpu.memory_space<vmem>>, %arg7: memref<1x256xf32, #tpu.memory_space<vmem>>) attributes {dimension_semantics = [#tpu.dimension_semantics<parallel>], iteration_bounds = array<i64: 1>, scalar_prefetch = 0 : i64, scratch_operands = 0 : i64, tpu.core_type = #tpu.core_type<tc>, window_params = [{transform_indices = @transform_0, window_bounds = array<i64: 256, 2>}, {pipeline_mode = #tpu.pipeline_mode<synchronous>, transform_indices = @transform_1, window_bounds = array<i64: 32, 2>}, {pipeline_mode = #tpu.pipeline_mode<synchronous>, transform_indices = @transform_2, window_bounds = array<i64: 32, 32>}, {pipeline_mode = #tpu.pipeline_mode<synchronous>, transform_indices = @transform_3, window_bounds = array<i64: 32, 32>}, {pipeline_mode = #tpu.pipeline_mode<synchronous>, transform_indices = @transform_4, window_bounds = array<i64: 1, 32>}, {pipeline_mode = #tpu.pipeline_mode<synchronous>, transform_indices = @transform_5, window_bounds = array<i64: 104, 1>}, {transform_indices = @transform_6, window_bounds = array<i64: 1, 256>}]} {
    %c0 = arith.constant 0 : index
    %c0_0 = arith.constant 0 : index
    %0 = vector.load %arg2[%c0, %c0_0] : memref<32x2xf32, #tpu.memory_space<vmem>>, vector<32x2xf32>
    %c0_1 = arith.constant 0 : index
    %c0_2 = arith.constant 0 : index
    %1 = vector.load %arg6[%c0_1, %c0_2] : memref<104x1xf32, #tpu.memory_space<vmem>>, vector<32x1xf32>
    %c0_3 = arith.constant 0 : index
    %c0_4 = arith.constant 0 : index
    %2 = vector.load %arg1[%c0_3, %c0_4] : memref<256x2xf32, #tpu.memory_space<vmem>>, vector<256x2xf32>
    %cst = arith.constant dense<0.000000e+00> : vector<32x256xf32>
    %3 = tpu.matmul %0, %2, %cst {dimension_numbers = #tpu.dot_dimension_numbers<[1], [1], [0], [0], [0, 0, 1, 0], [], []>} : vector<32x2xf32>, vector<256x2xf32>, vector<32x256xf32> -> vector<32x256xf32>
    %4 = vector.broadcast %1 : vector<32x1xf32> to vector<32x256xf32>
    %5 = arith.addf %3, %4 : vector<32x256xf32>
    %6 = math.tanh %5 : vector<32x256xf32>
    %c0_5 = arith.constant 0 : index
    %c0_6 = arith.constant 0 : index
    %7 = vector.load %arg3[%c0_5, %c0_6] : memref<32x32xf32, #tpu.memory_space<vmem>>, vector<32x32xf32>
    %c32 = arith.constant 32 : index
    %c0_7 = arith.constant 0 : index
    %8 = vector.load %arg6[%c32, %c0_7] : memref<104x1xf32, #tpu.memory_space<vmem>>, vector<32x1xf32>
    %cst_8 = arith.constant dense<0.000000e+00> : vector<32x256xf32>
    %9 = tpu.matmul %7, %6, %cst_8 {dimension_numbers = #tpu.dot_dimension_numbers<[1], [0], [0], [1], [0, 0, 1, 1], [], []>} : vector<32x32xf32>, vector<32x256xf32>, vector<32x256xf32> -> vector<32x256xf32>
    %10 = vector.broadcast %8 : vector<32x1xf32> to vector<32x256xf32>
    %11 = arith.addf %9, %10 : vector<32x256xf32>
    %12 = math.tanh %11 : vector<32x256xf32>
    %c0_9 = arith.constant 0 : index
    %c0_10 = arith.constant 0 : index
    %13 = vector.load %arg4[%c0_9, %c0_10] : memref<32x32xf32, #tpu.memory_space<vmem>>, vector<32x32xf32>
    %c64 = arith.constant 64 : index
    %c0_11 = arith.constant 0 : index
    %14 = vector.load %arg6[%c64, %c0_11] : memref<104x1xf32, #tpu.memory_space<vmem>>, vector<32x1xf32>
    %cst_12 = arith.constant dense<0.000000e+00> : vector<32x256xf32>
    %15 = tpu.matmul %13, %12, %cst_12 {dimension_numbers = #tpu.dot_dimension_numbers<[1], [0], [0], [1], [0, 0, 1, 1], [], []>} : vector<32x32xf32>, vector<32x256xf32>, vector<32x256xf32> -> vector<32x256xf32>
    %16 = vector.broadcast %14 : vector<32x1xf32> to vector<32x256xf32>
    %17 = arith.addf %15, %16 : vector<32x256xf32>
    %18 = math.tanh %17 : vector<32x256xf32>
    %c0_13 = arith.constant 0 : index
    %c0_14 = arith.constant 0 : index
    %19 = vector.load %arg5[%c0_13, %c0_14] : memref<1x32xf32, #tpu.memory_space<vmem>>, vector<1x32xf32>
    %c96 = arith.constant 96 : index
    %c0_15 = arith.constant 0 : index
    %20 = vector.load %arg6[%c96, %c0_15] : memref<104x1xf32, #tpu.memory_space<vmem>>, vector<1x1xf32>
    %cst_16 = arith.constant dense<0.000000e+00> : vector<1x256xf32>
    %21 = tpu.matmul %19, %18, %cst_16 {dimension_numbers = #tpu.dot_dimension_numbers<[1], [0], [0], [1], [0, 0, 1, 1], [], []>} : vector<1x32xf32>, vector<32x256xf32>, vector<1x256xf32> -> vector<1x256xf32>
    %22 = vector.broadcast %20 : vector<1x1xf32> to vector<1x256xf32>
    %23 = arith.addf %21, %22 : vector<1x256xf32>
    %c0_17 = arith.constant 0 : index
    %c0_18 = arith.constant 0 : index
    %24 = vector.load %arg7[%c0_17, %c0_18] : memref<1x256xf32, #tpu.memory_space<vmem>>, vector<1x256xf32>
    tpu.vector_store %arg7[%c0_17, %c0_18], %23 {strides = array<i32>} : memref<1x256xf32, #tpu.memory_space<vmem>>, vector<1x256xf32>,
    return
  }
  func.func @transform_0(%arg0: i32) -> (i32, i32) {
    %c0_i32 = arith.constant 0 : i32
    %c0_i32_0 = arith.constant 0 : i32
    return %arg0, %c0_i32 : i32, i32
  }
  func.func @transform_1(%arg0: i32) -> (i32, i32) {
    %c0_i32 = arith.constant 0 : i32
    %c0_i32_0 = arith.constant 0 : i32
    %c0_i32_1 = arith.constant 0 : i32
    return %c0_i32, %c0_i32_0 : i32, i32
  }
  func.func @transform_2(%arg0: i32) -> (i32, i32) {
    %c0_i32 = arith.constant 0 : i32
    %c0_i32_0 = arith.constant 0 : i32
    %c0_i32_1 = arith.constant 0 : i32
    return %c0_i32, %c0_i32_0 : i32, i32
  }
  func.func @transform_3(%arg0: i32) -> (i32, i32) {
    %c0_i32 = arith.constant 0 : i32
    %c0_i32_0 = arith.constant 0 : i32
    %c0_i32_1 = arith.constant 0 : i32
    return %c0_i32, %c0_i32_0 : i32, i32
  }
  func.func @transform_4(%arg0: i32) -> (i32, i32) {
    %c0_i32 = arith.constant 0 : i32
    %c0_i32_0 = arith.constant 0 : i32
    %c0_i32_1 = arith.constant 0 : i32
    return %c0_i32, %c0_i32_0 : i32, i32
  }
  func.func @transform_5(%arg0: i32) -> (i32, i32) {
    %c0_i32 = arith.constant 0 : i32
    %c0_i32_0 = arith.constant 0 : i32
    %c0_i32_1 = arith.constant 0 : i32
    return %c0_i32, %c0_i32_0 : i32, i32
  }
  func.func @transform_6(%arg0: i32) -> (i32, i32) {
    %c0_i32 = arith.constant 0 : i32
    %c0_i32_0 = arith.constant 0 : i32
    return %c0_i32, %arg0 : i32, i32
  }
}

</mosaic_0001>

<llo_original>
// kernel: dnn_forward.1
$region0: #{dnn_forward.1}
  #allocation0 [shape = 'u32[]', space=smem, size = 0x4, offset = 0x4, fixed_abs, tag = 'smem constant byte address 0x4 - core index']
  #allocation1 [shape = 'u32[144,128]{1,0:T(1,128)}', space=vmem, size = 0x12000, scoped, tag = 'internal scratch']
  %s0 = inlined_call_operand.vmem [shape: f32[256,2], index: 0, kind: input, shape index: {}]
  %s1 = inlined_call_operand.vmem [shape: f32[32,2], index: 1, kind: input, shape index: {}]
  %s2 = inlined_call_operand.vmem [shape: f32[32,32], index: 2, kind: input, shape index: {}]
  %s3 = inlined_call_operand.vmem [shape: f32[32,32], index: 3, kind: input, shape index: {}]
  %s4 = inlined_call_operand.vmem [shape: f32[1,32], index: 4, kind: input, shape index: {}]
  %s5 = inlined_call_operand.vmem [shape: f32[104,1], index: 5, kind: input, shape index: {}]
  %s6 = inlined_call_operand.hbm [shape: f32[1,256], index: 6, kind: output, shape index: {}]
  %s7 = sld [smem:[#allocation0]]
  $region34: #{dnn_forward.1} parent=0
    _
  %s9 = ssub.s32 1, %s7
  %s10 = scalar_select 0, %s9, %s7
  $region1: #{dnn_forward.1} parent=0
    #allocation2 [shape = 'u8[1024]{0}', space=vmem, size = 0x400, scoped, tag = 'output window, operand 0, single buffered']
    #allocation3 [shape = 's32[1]{0}', space=sflag, size = 0x4, scoped, tag = 'scoped memory for dnn_forward.1']
    %11 = vsyncpa [#allocation3], 0
    // Predicated region
    $region2: #{dnn_forward.1} parent=1 // pred_check
      _
    $region3: #{dnn_forward.1} parent=1 // pred_check_branch
      %13 = sbr.rel (0) target = $region5
    $region4: #{dnn_forward.1} parent=1 // pred_region
      _
    $region5: #{dnn_forward.1} parent=1 // pred_fallthru
      _
    // Predicated region
    $region6: #{dnn_forward.1} parent=1 // pred_check
      _
    $region7: #{dnn_forward.1} parent=1 // pred_check_branch
      %15 = sbr.rel (0) target = $region9
    $region8: #{dnn_forward.1} parent=1 // pred_region
      _
    $region9: #{dnn_forward.1} parent=1 // pred_fallthru
      _
    // Predicated region
    $region10: #{dnn_forward.1} parent=1 // pred_check
      _
    $region11: #{dnn_forward.1} parent=1 // pred_check_branch
      %17 = sbr.rel (0) target = $region13
    $region12: #{dnn_forward.1} parent=1 // pred_region
      _
    $region13: #{dnn_forward.1} parent=1 // pred_fallthru
      _
    // Predicated region
    $region14: #{dnn_forward.1} parent=1 // pred_check
      _
    $region15: #{dnn_forward.1} parent=1 // pred_check_branch
      %19 = sbr.rel (0) target = $region17
    $region16: #{dnn_forward.1} parent=1 // pred_region
      _
    $region17: #{dnn_forward.1} parent=1 // pred_fallthru
      _
    // Predicated region
    $region18: #{dnn_forward.1} parent=1 // pred_check
      _
    $region19: #{dnn_forward.1} parent=1 // pred_check_branch
      %21 = sbr.rel (0) target = $region21
    $region20: #{dnn_forward.1} parent=1 // pred_region
      _
    $region21: #{dnn_forward.1} parent=1 // pred_fallthru
      _
    // Predicated region
    $region22: #{dnn_forward.1} parent=1 // pred_check
      _
    $region23: #{dnn_forward.1} parent=1 // pred_check_branch
      %23 = sbr.rel (0) target = $region25
    $region24: #{dnn_forward.1} parent=1 // pred_region
      _
    $region25: #{dnn_forward.1} parent=1 // pred_fallthru
      _
    %v24 = vld [vmem:[%s1] sm:$0xff]
    %v25 = vld [vmem:[%s1 + $0x8] sm:$0xff]
    %v26 = vld [vmem:[%s1 + $0x10] sm:$0xff]
    %v27 = vld [vmem:[%s1 + $0x18] sm:$0xff]
    %v28 = vld [vmem:[%s5] sm:$0xff]
    %v29 = vld [vmem:[%s5 + $0x8] sm:$0xff]
    %v30 = vld [vmem:[%s5 + $0x10] sm:$0xff]
    %v31 = vld [vmem:[%s5 + $0x18] sm:$0xff]
    %v32 = vld [vmem:[%s0] sm:$0xff]
    %v33 = vld [vmem:[%s0 + $0x8] sm:$0xff]
    %v34 = vld [vmem:[%s0 + $0x10] sm:$0xff]
    %v35 = vld [vmem:[%s0 + $0x18] sm:$0xff]
    %v36 = vld [vmem:[%s0 + $0x20] sm:$0xff]
    %v37 = vld [vmem:[%s0 + $0x28] sm:$0xff]
    %v38 = vld [vmem:[%s0 + $0x30] sm:$0xff]
    %v39 = vld [vmem:[%s0 + $0x38] sm:$0xff]
    %v40 = vld [vmem:[%s0 + $0x40] sm:$0xff]
    %v41 = vld [vmem:[%s0 + $0x48] sm:$0xff]
    %v42 = vld [vmem:[%s0 + $0x50] sm:$0xff]
    %v43 = vld [vmem:[%s0 + $0x58] sm:$0xff]
    %v44 = vld [vmem:[%s0 + $0x60] sm:$0xff]
    %v45 = vld [vmem:[%s0 + $0x68] sm:$0xff]
    %v46 = vld [vmem:[%s0 + $0x70] sm:$0xff]
    %v47 = vld [vmem:[%s0 + $0x78] sm:$0xff]
    %v48 = vld [vmem:[%s0 + $0x80] sm:$0xff]
    %v49 = vld [vmem:[%s0 + $0x88] sm:$0xff]
    %v50 = vld [vmem:[%s0 + $0x90] sm:$0xff]
    %v51 = vld [vmem:[%s0 + $0x98] sm:$0xff]
    %v52 = vld [vmem:[%s0 + $0xa0] sm:$0xff]
    %v53 = vld [vmem:[%s0 + $0xa8] sm:$0xff]
    %v54 = vld [vmem:[%s0 + $0xb0] sm:$0xff]
    %v55 = vld [vmem:[%s0 + $0xb8] sm:$0xff]
    %v56 = vld [vmem:[%s0 + $0xc0] sm:$0xff]
    %v57 = vld [vmem:[%s0 + $0xc8] sm:$0xff]
    %v58 = vld [vmem:[%s0 + $0xd0] sm:$0xff]
    %v59 = vld [vmem:[%s0 + $0xd8] sm:$0xff]
    %v60 = vld [vmem:[%s0 + $0xe0] sm:$0xff]
    %v61 = vld [vmem:[%s0 + $0xe8] sm:$0xff]
    %v62 = vld [vmem:[%s0 + $0xf0] sm:$0xff]
    %v63 = vld [vmem:[%s0 + $0xf8] sm:$0xff]
    %65 = vset.pattern.permute.xlu0 0
    %66 = vperm.xlu0 %65, %v28
    %v67 = vpop.permute.xlu0 %66
    %70 = vset.pattern.permute.xlu0 0
    %71 = vperm.xlu0 %70, %v29
    %v72 = vpop.permute.xlu0 %71
    %75 = vset.pattern.permute.xlu0 0
    %76 = vperm.xlu0 %75, %v30
    %v77 = vpop.permute.xlu0 %76
    %80 = vset.pattern.permute.xlu0 0
    %81 = vperm.xlu0 %80, %v31
    %v82 = vpop.permute.xlu0 %81
    %vm84 = vcmask 15360
    %v86 = vsel %vm84, %v24, 0
    %v89 = vsel %vm84, %v25, 0
    %v92 = vsel %vm84, %v26, 0
    %v95 = vsel %vm84, %v27, 0
    %v98 = vsel %vm84, %v32, 0
    %v101 = vsel %vm84, %v33, 0
    %v104 = vsel %vm84, %v34, 0
    %v107 = vsel %vm84, %v35, 0
    %v110 = vsel %vm84, %v36, 0
    %v113 = vsel %vm84, %v37, 0
    %v116 = vsel %vm84, %v38, 0
    %v119 = vsel %vm84, %v39, 0
    %v122 = vsel %vm84, %v40, 0
    %v125 = vsel %vm84, %v41, 0
    %v128 = vsel %vm84, %v42, 0
    %v131 = vsel %vm84, %v43, 0
    %v134 = vsel %vm84, %v44, 0
    %v137 = vsel %vm84, %v45, 0
    %v140 = vsel %vm84, %v46, 0
    %v143 = vsel %vm84, %v47, 0
    %v146 = vsel %vm84, %v48, 0
    %v149 = vsel %vm84, %v49, 0
    %v152 = vsel %vm84, %v50, 0
    %v155 = vsel %vm84, %v51, 0
    %v158 = vsel %vm84, %v52, 0
    %v161 = vsel %vm84, %v53, 0
    %v164 = vsel %vm84, %v54, 0
    %v167 = vsel %vm84, %v55, 0
    %v170 = vsel %vm84, %v56, 0
    %v173 = vsel %vm84, %v57, 0
    %v176 = vsel %vm84, %v58, 0
    %v179 = vsel %vm84, %v59, 0
    %v182 = vsel %vm84, %v60, 0
    %v185 = vsel %vm84, %v61, 0
    %v188 = vsel %vm84, %v62, 0
    %v191 = vsel %vm84, %v63, 0
    %193 = vmatprep.subr.mxu0 0.0
    %194 = vmatpush1.xpose.msra.mxu0 %v143
    %195 = vmatprep.subr.mxu0 0.0
    %196 = vmatpush1.xpose.msra.mxu0 %v140
    %197 = vmatprep.subr.mxu0 0.0
    %198 = vmatpush1.xpose.msra.mxu0 %v137
    %199 = vmatprep.subr.mxu0 0.0
    %200 = vmatpush1.xpose.msra.mxu0 %v134
    %201 = vmatprep.subr.mxu0 0.0
    %202 = vmatpush1.xpose.msra.mxu0 %v131
    %203 = vmatprep.subr.mxu0 0.0
    %204 = vmatpush1.xpose.msra.mxu0 %v128
    %205 = vmatprep.subr.mxu0 0.0
    %206 = vmatpush1.xpose.msra.mxu0 %v125
    %207 = vmatprep.subr.mxu0 0.0
    %208 = vmatpush1.xpose.msra.mxu0 %v122
    %209 = vmatprep.subr.mxu0 0.0
    %210 = vmatpush1.xpose.msra.mxu0 %v119
    %211 = vmatprep.subr.mxu0 0.0
    %212 = vmatpush1.xpose.msra.mxu0 %v116
    %213 = vmatprep.subr.mxu0 0.0
    %214 = vmatpush1.xpose.msra.mxu0 %v113
    %215 = vmatprep.subr.mxu0 0.0
    %216 = vmatpush1.xpose.msra.mxu0 %v110
    %217 = vmatprep.subr.mxu0 0.0
    %218 = vmatpush1.xpose.msra.mxu0 %v107
    %219 = vmatprep.subr.mxu0 0.0
    %220 = vmatpush1.xpose.msra.mxu0 %v104
    %221 = vmatprep.subr.mxu0 0.0
    %222 = vmatpush1.xpose.msra.mxu0 %v101
    %223 = vmatprep.subr.mxu0 0.0
    %224 = vmatpush1.xpose.msra.mxu0 %v98
    %225 = vmatprep.subr.mxu0 0.0
    %226 = vmatpush2.xpose.msra.mxu0 %v191
    %227 = vmatprep.subr.mxu0 0.0
    %228 = vmatpush2.xpose.msra.mxu0 %v188
    %229 = vmatprep.subr.mxu0 0.0
    %230 = vmatpush2.xpose.msra.mxu0 %v185
    %231 = vmatprep.subr.mxu0 0.0
    %232 = vmatpush2.xpose.msra.mxu0 %v182
    %233 = vmatprep.subr.mxu0 0.0
    %234 = vmatpush2.xpose.msra.mxu0 %v179
    %235 = vmatprep.subr.mxu0 0.0
    %236 = vmatpush2.xpose.msra.mxu0 %v176
    %237 = vmatprep.subr.mxu0 0.0
    %238 = vmatpush2.xpose.msra.mxu0 %v173
    %239 = vmatprep.subr.mxu0 0.0
    %240 = vmatpush2.xpose.msra.mxu0 %v170
    %241 = vmatprep.subr.mxu0 0.0
    %242 = vmatpush2.xpose.msra.mxu0 %v167
    %243 = vmatprep.subr.mxu0 0.0
    %244 = vmatpush2.xpose.msra.mxu0 %v164
    %245 = vmatprep.subr.mxu0 0.0
    %246 = vmatpush2.xpose.msra.mxu0 %v161
    %247 = vmatprep.subr.mxu0 0.0
    %248 = vmatpush2.xpose.msra.mxu0 %v158
    %249 = vmatprep.subr.mxu0 0.0
    %250 = vmatpush2.xpose.msra.mxu0 %v155
    %251 = vmatprep.subr.mxu0 0.0
    %252 = vmatpush2.xpose.msra.mxu0 %v152
    %253 = vmatprep.subr.mxu0 0.0
    %254 = vmatpush2.xpose.msra.mxu0 %v149
    %255 = vmatprep.subr.mxu0 0.0
    %256 = vmatpush2.xpose.msra.mxu0 %v146
    %257 = vmatprep.mubr.f32.mxu0 0.0
    %258 = vmatmul.mubr.f32.gmra.mxu0 %v86
    %v259 = vpop.f32.mrf.mxu0
    %v260 = vadd.f32 %v67, %v259
    %v261 = vpop.f32.mrf.mxu0
    %v262 = vadd.f32 %v67, %v261
    %263 = vmatprep.mubr.f32.mxu0 0.0
    %264 = vmatmul.mubr.f32.gmra.mxu0 %v89
    %v265 = vpop.f32.mrf.mxu0
    %v266 = vadd.f32 %v72, %v265
    %v267 = vpop.f32.mrf.mxu0
    %v268 = vadd.f32 %v72, %v267
    %269 = vmatprep.mubr.f32.mxu0 0.0
    %270 = vmatmul.mubr.f32.gmra.mxu0 %v92
    %v271 = vpop.f32.mrf.mxu0
    %v272 = vadd.f32 %v77, %v271
    %v273 = vpop.f32.mrf.mxu0
    %v274 = vadd.f32 %v77, %v273
    %275 = vmatprep.mubr.f32.mxu0 0.0
    %276 = vmatmul.mubr.f32.gmra.mxu0 %v95
    %v277 = vpop.f32.mrf.mxu0
    %v278 = vadd.f32 %v82, %v277
    %v279 = vpop.f32.mrf.mxu0
    %v280 = vadd.f32 %v82, %v279
    %281 = vdwg.mxu0
    %v282 = vtanh.pop %v260
    %v283 = vtanh.pop %v262
    %v284 = vtanh.pop %v266
    %v285 = vtanh.pop %v268
    %v286 = vtanh.pop %v272
    %v287 = vtanh.pop %v274
    %v288 = vtanh.pop %v278
    %v289 = vtanh.pop %v280
    %v290 = vld [vmem:[%s2] sm:$0xff]
    %v291 = vld [vmem:[%s2 + $0x8] sm:$0xff]
    %v292 = vld [vmem:[%s2 + $0x10] sm:$0xff]
    %v293 = vld [vmem:[%s2 + $0x18] sm:$0xff]
    %v294 = vld [vmem:[%s5 + $0x20] sm:$0xff]
    %v295 = vld [vmem:[%s5 + $0x28] sm:$0xff]
    %v296 = vld [vmem:[%s5 + $0x30] sm:$0xff]
    %v297 = vld [vmem:[%s5 + $0x38] sm:$0xff]
    %299 = vset.pattern.permute.xlu0 0
    %300 = vperm.xlu0 %299, %v294
    %v301 = vpop.permute.xlu0 %300
    %304 = vset.pattern.permute.xlu0 0
    %305 = vperm.xlu0 %304, %v295
    %v306 = vpop.permute.xlu0 %305
    %309 = vset.pattern.permute.xlu0 0
    %310 = vperm.xlu0 %309, %v296
    %v311 = vpop.permute.xlu0 %310
    %314 = vset.pattern.permute.xlu0 0
    %315 = vperm.xlu0 %314, %v297
    %v316 = vpop.permute.xlu0 %315
    %vm318 = vcmask 261120
    %v320 = vsel %vm318, %v290, 0
    %v323 = vsel %vm318, %v291, 0
    %v326 = vsel %vm318, %v292, 0
    %v329 = vsel %vm318, %v293, 0
    %331 = vmatprep.subr.mxu0 0.0
    %332 = vmatpush1.msra.mxu0 0.0
    %333 = vmatprep.subr.mxu0 0.0
    %334 = vmatpush1.msra.mxu0 0.0
    %335 = vmatprep.subr.mxu0 0.0
    %336 = vmatpush1.msra.mxu0 0.0
    %337 = vmatprep.subr.mxu0 0.0
    %338 = vmatpush1.msra.mxu0 0.0
    %339 = vmatprep.subr.mxu0 0.0
    %340 = vmatpush1.msra.mxu0 0.0
    %341 = vmatprep.subr.mxu0 0.0
    %342 = vmatpush1.msra.mxu0 0.0
    %343 = vmatprep.subr.mxu0 0.0
    %344 = vmatpush1.msra.mxu0 0.0
    %345 = vmatprep.subr.mxu0 0.0
    %346 = vmatpush1.msra.mxu0 0.0
    %347 = vmatprep.subr.mxu0 0.0
    %348 = vmatpush1.msra.mxu0 0.0
    %349 = vmatprep.subr.mxu0 0.0
    %350 = vmatpush1.msra.mxu0 0.0
    %351 = vmatprep.subr.mxu0 0.0
    %352 = vmatpush1.msra.mxu0 0.0
    %353 = vmatprep.subr.mxu0 0.0
    %354 = vmatpush1.msra.mxu0 0.0
    %355 = vmatprep.subr.mxu0 %v289
    %356 = vmatpush1.msra.mxu0 %v288
    %357 = vmatprep.subr.mxu0 %v287
    %358 = vmatpush1.msra.mxu0 %v286
    %359 = vmatprep.subr.mxu0 %v285
    %360 = vmatpush1.msra.mxu0 %v284
    %361 = vmatprep.subr.mxu0 %v283
    %362 = vmatpush1.msra.mxu0 %v282
    %363 = vmatprep.subr.mxu0 0.0
    %364 = vmatpush2.msra.mxu0 0.0
    %365 = vmatprep.subr.mxu0 0.0
    %366 = vmatpush2.msra.mxu0 0.0
    %367 = vmatprep.subr.mxu0 0.0
    %368 = vmatpush2.msra.mxu0 0.0
    %369 = vmatprep.subr.mxu0 0.0
    %370 = vmatpush2.msra.mxu0 0.0
    %371 = vmatprep.subr.mxu0 0.0
    %372 = vmatpush2.msra.mxu0 0.0
    %373 = vmatprep.subr.mxu0 0.0
    %374 = vmatpush2.msra.mxu0 0.0
    %375 = vmatprep.subr.mxu0 0.0
    %376 = vmatpush2.msra.mxu0 0.0
    %377 = vmatprep.subr.mxu0 0.0
    %378 = vmatpush2.msra.mxu0 0.0
    %379 = vmatprep.subr.mxu0 0.0
    %380 = vmatpush2.msra.mxu0 0.0
    %381 = vmatprep.subr.mxu0 0.0
    %382 = vmatpush2.msra.mxu0 0.0
    %383 = vmatprep.subr.mxu0 0.0
    %384 = vmatpush2.msra.mxu0 0.0
    %385 = vmatprep.subr.mxu0 0.0
    %386 = vmatpush2.msra.mxu0 0.0
    %387 = vmatprep.subr.mxu0 0.0
    %388 = vmatpush2.msra.mxu0 0.0
    %389 = vmatprep.subr.mxu0 0.0
    %390 = vmatpush2.msra.mxu0 0.0
    %391 = vmatprep.subr.mxu0 0.0
    %392 = vmatpush2.msra.mxu0 0.0
    %393 = vmatprep.subr.mxu0 0.0
    %394 = vmatpush2.msra.mxu0 0.0
    %395 = vmatprep.mubr.f32.mxu0 0.0
    %396 = vmatmul.mubr.f32.gmra.mxu0 %v320
    %v397 = vpop.f32.mrf.mxu0
    %v398 = vadd.f32 %v301, %v397
    %v399 = vpop.f32.mrf.mxu0
    %v400 = vadd.f32 %v301, %v399
    %401 = vmatprep.mubr.f32.mxu0 0.0
    %402 = vmatmul.mubr.f32.gmra.mxu0 %v323
    %v403 = vpop.f32.mrf.mxu0
    %v404 = vadd.f32 %v306, %v403
    %v405 = vpop.f32.mrf.mxu0
    %v406 = vadd.f32 %v306, %v405
    %407 = vmatprep.mubr.f32.mxu0 0.0
    %408 = vmatmul.mubr.f32.gmra.mxu0 %v326
    %v409 = vpop.f32.mrf.mxu0
    %v410 = vadd.f32 %v311, %v409
    %v411 = vpop.f32.mrf.mxu0
    %v412 = vadd.f32 %v311, %v411
    %413 = vmatprep.mubr.f32.mxu0 0.0
    %414 = vmatmul.mubr.f32.gmra.mxu0 %v329
    %v415 = vpop.f32.mrf.mxu0
    %v416 = vadd.f32 %v316, %v415
    %v417 = vpop.f32.mrf.mxu0
    %v418 = vadd.f32 %v316, %v417
    %419 = vdwg.mxu0
    %v420 = vtanh.pop %v398
    %v421 = vtanh.pop %v400
    %v422 = vtanh.pop %v404
    %v423 = vtanh.pop %v406
    %v424 = vtanh.pop %v410
    %v425 = vtanh.pop %v412
    %v426 = vtanh.pop %v416
    %v427 = vtanh.pop %v418
    %v428 = vld [vmem:[%s3] sm:$0xff]
    %v429 = vld [vmem:[%s3 + $0x8] sm:$0xff]
    %v430 = vld [vmem:[%s3 + $0x10] sm:$0xff]
    %v431 = vld [vmem:[%s3 + $0x18] sm:$0xff]
    %v432 = vld [vmem:[%s5 + $0x40] sm:$0xff]
    %v433 = vld [vmem:[%s5 + $0x48] sm:$0xff]
    %v434 = vld [vmem:[%s5 + $0x50] sm:$0xff]
    %v435 = vld [vmem:[%s5 + $0x58] sm:$0xff]
    %437 = vset.pattern.permute.xlu0 0
    %438 = vperm.xlu0 %437, %v432
    %v439 = vpop.permute.xlu0 %438
    %442 = vset.pattern.permute.xlu0 0
    %443 = vperm.xlu0 %442, %v433
    %v444 = vpop.permute.xlu0 %443
    %447 = vset.pattern.permute.xlu0 0
    %448 = vperm.xlu0 %447, %v434
    %v449 = vpop.permute.xlu0 %448
    %452 = vset.pattern.permute.xlu0 0
    %453 = vperm.xlu0 %452, %v435
    %v454 = vpop.permute.xlu0 %453
    %v457 = vsel %vm318, %v428, 0
    %v460 = vsel %vm318, %v429, 0
    %v463 = vsel %vm318, %v430, 0
    %v466 = vsel %vm318, %v431, 0
    %468 = vmatprep.subr.mxu0 0.0
    %469 = vmatpush1.msra.mxu0 0.0
    %470 = vmatprep.subr.mxu0 0.0
    %471 = vmatpush1.msra.mxu0 0.0
    %472 = vmatprep.subr.mxu0 0.0
    %473 = vmatpush1.msra.mxu0 0.0
    %474 = vmatprep.subr.mxu0 0.0
    %475 = vmatpush1.msra.mxu0 0.0
    %476 = vmatprep.subr.mxu0 0.0
    %477 = vmatpush1.msra.mxu0 0.0
    %478 = vmatprep.subr.mxu0 0.0
    %479 = vmatpush1.msra.mxu0 0.0
    %480 = vmatprep.subr.mxu0 0.0
    %481 = vmatpush1.msra.mxu0 0.0
    %482 = vmatprep.subr.mxu0 0.0
    %483 = vmatpush1.msra.mxu0 0.0
    %484 = vmatprep.subr.mxu0 0.0
    %485 = vmatpush1.msra.mxu0 0.0
    %486 = vmatprep.subr.mxu0 0.0
    %487 = vmatpush1.msra.mxu0 0.0
    %488 = vmatprep.subr.mxu0 0.0
    %489 = vmatpush1.msra.mxu0 0.0
    %490 = vmatprep.subr.mxu0 0.0
    %491 = vmatpush1.msra.mxu0 0.0
    %492 = vmatprep.subr.mxu0 %v427
    %493 = vmatpush1.msra.mxu0 %v426
    %494 = vmatprep.subr.mxu0 %v425
    %495 = vmatpush1.msra.mxu0 %v424
    %496 = vmatprep.subr.mxu0 %v423
    %497 = vmatpush1.msra.mxu0 %v422
    %498 = vmatprep.subr.mxu0 %v421
    %499 = vmatpush1.msra.mxu0 %v420
    %500 = vmatprep.subr.mxu0 0.0
    %501 = vmatpush2.msra.mxu0 0.0
    %502 = vmatprep.subr.mxu0 0.0
    %503 = vmatpush2.msra.mxu0 0.0
    %504 = vmatprep.subr.mxu0 0.0
    %505 = vmatpush2.msra.mxu0 0.0
    %506 = vmatprep.subr.mxu0 0.0
    %507 = vmatpush2.msra.mxu0 0.0
    %508 = vmatprep.subr.mxu0 0.0
    %509 = vmatpush2.msra.mxu0 0.0
    %510 = vmatprep.subr.mxu0 0.0
    %511 = vmatpush2.msra.mxu0 0.0
    %512 = vmatprep.subr.mxu0 0.0
    %513 = vmatpush2.msra.mxu0 0.0
    %514 = vmatprep.subr.mxu0 0.0
    %515 = vmatpush2.msra.mxu0 0.0
    %516 = vmatprep.subr.mxu0 0.0
    %517 = vmatpush2.msra.mxu0 0.0
    %518 = vmatprep.subr.mxu0 0.0
    %519 = vmatpush2.msra.mxu0 0.0
    %520 = vmatprep.subr.mxu0 0.0
    %521 = vmatpush2.msra.mxu0 0.0
    %522 = vmatprep.subr.mxu0 0.0
    %523 = vmatpush2.msra.mxu0 0.0
    %524 = vmatprep.subr.mxu0 0.0
    %525 = vmatpush2.msra.mxu0 0.0
    %526 = vmatprep.subr.mxu0 0.0
    %527 = vmatpush2.msra.mxu0 0.0
    %528 = vmatprep.subr.mxu0 0.0
    %529 = vmatpush2.msra.mxu0 0.0
    %530 = vmatprep.subr.mxu0 0.0
    %531 = vmatpush2.msra.mxu0 0.0
    %532 = vmatprep.mubr.f32.mxu0 0.0
    %533 = vmatmul.mubr.f32.gmra.mxu0 %v457
    %v534 = vpop.f32.mrf.mxu0
    %v535 = vadd.f32 %v439, %v534
    %v536 = vpop.f32.mrf.mxu0
    %v537 = vadd.f32 %v439, %v536
    %538 = vmatprep.mubr.f32.mxu0 0.0
    %539 = vmatmul.mubr.f32.gmra.mxu0 %v460
    %v540 = vpop.f32.mrf.mxu0
    %v541 = vadd.f32 %v444, %v540
    %v542 = vpop.f32.mrf.mxu0
    %v543 = vadd.f32 %v444, %v542
    %544 = vmatprep.mubr.f32.mxu0 0.0
    %545 = vmatmul.mubr.f32.gmra.mxu0 %v463
    %v546 = vpop.f32.mrf.mxu0
    %v547 = vadd.f32 %v449, %v546
    %v548 = vpop.f32.mrf.mxu0
    %v549 = vadd.f32 %v449, %v548
    %550 = vmatprep.mubr.f32.mxu0 0.0
    %551 = vmatmul.mubr.f32.gmra.mxu0 %v466
    %v552 = vpop.f32.mrf.mxu0
    %v553 = vadd.f32 %v454, %v552
    %v554 = vpop.f32.mrf.mxu0
    %v555 = vadd.f32 %v454, %v554
    %556 = vdwg.mxu0
    %v557 = vtanh.pop %v535
    %v558 = vtanh.pop %v537
    %v559 = vtanh.pop %v541
    %v560 = vtanh.pop %v543
    %v561 = vtanh.pop %v547
    %v562 = vtanh.pop %v549
    %v563 = vtanh.pop %v553
    %v564 = vtanh.pop %v555
    %v565 = vld [vmem:[%s4] sm:$0x1]
    %v566 = vld [vmem:[%s5 + $0x60] sm:$0x1]
    %568 = vset.pattern.permute.xlu0 0
    %569 = vperm.xlu0 %568, %v566
    %v570 = vpop.permute.xlu0 %569
    %v573 = vsel %vm318, %v565, 0
    %575 = vmatprep.subr.mxu0 0.0
    %576 = vmatpush1.msra.mxu0 0.0
    %577 = vmatprep.subr.mxu0 0.0
    %578 = vmatpush1.msra.mxu0 0.0
    %579 = vmatprep.subr.mxu0 0.0
    %580 = vmatpush1.msra.mxu0 0.0
    %581 = vmatprep.subr.mxu0 0.0
    %582 = vmatpush1.msra.mxu0 0.0
    %583 = vmatprep.subr.mxu0 0.0
    %584 = vmatpush1.msra.mxu0 0.0
    %585 = vmatprep.subr.mxu0 0.0
    %586 = vmatpush1.msra.mxu0 0.0
    %587 = vmatprep.subr.mxu0 0.0
    %588 = vmatpush1.msra.mxu0 0.0
    %589 = vmatprep.subr.mxu0 0.0
    %590 = vmatpush1.msra.mxu0 0.0
    %591 = vmatprep.subr.mxu0 0.0
    %592 = vmatpush1.msra.mxu0 0.0
    %593 = vmatprep.subr.mxu0 0.0
    %594 = vmatpush1.msra.mxu0 0.0
    %595 = vmatprep.subr.mxu0 0.0
    %596 = vmatpush1.msra.mxu0 0.0
    %597 = vmatprep.subr.mxu0 0.0
    %598 = vmatpush1.msra.mxu0 0.0
    %599 = vmatprep.subr.mxu0 %v564
    %600 = vmatpush1.msra.mxu0 %v563
    %601 = vmatprep.subr.mxu0 %v562
    %602 = vmatpush1.msra.mxu0 %v561
    %603 = vmatprep.subr.mxu0 %v560
    %604 = vmatpush1.msra.mxu0 %v559
    %605 = vmatprep.subr.mxu0 %v558
    %606 = vmatpush1.msra.mxu0 %v557
    %607 = vmatprep.subr.mxu0 0.0
    %608 = vmatpush2.msra.mxu0 0.0
    %609 = vmatprep.subr.mxu0 0.0
    %610 = vmatpush2.msra.mxu0 0.0
    %611 = vmatprep.subr.mxu0 0.0
    %612 = vmatpush2.msra.mxu0 0.0
    %613 = vmatprep.subr.mxu0 0.0
    %614 = vmatpush2.msra.mxu0 0.0
    %615 = vmatprep.subr.mxu0 0.0
    %616 = vmatpush2.msra.mxu0 0.0
    %617 = vmatprep.subr.mxu0 0.0
    %618 = vmatpush2.msra.mxu0 0.0
    %619 = vmatprep.subr.mxu0 0.0
    %620 = vmatpush2.msra.mxu0 0.0
    %621 = vmatprep.subr.mxu0 0.0
    %622 = vmatpush2.msra.mxu0 0.0
    %623 = vmatprep.subr.mxu0 0.0
    %624 = vmatpush2.msra.mxu0 0.0
    %625 = vmatprep.subr.mxu0 0.0
    %626 = vmatpush2.msra.mxu0 0.0
    %627 = vmatprep.subr.mxu0 0.0
    %628 = vmatpush2.msra.mxu0 0.0
    %629 = vmatprep.subr.mxu0 0.0
    %630 = vmatpush2.msra.mxu0 0.0
    %631 = vmatprep.subr.mxu0 0.0
    %632 = vmatpush2.msra.mxu0 0.0
    %633 = vmatprep.subr.mxu0 0.0
    %634 = vmatpush2.msra.mxu0 0.0
    %635 = vmatprep.subr.mxu0 0.0
    %636 = vmatpush2.msra.mxu0 0.0
    %637 = vmatprep.subr.mxu0 0.0
    %638 = vmatpush2.msra.mxu0 0.0
    %639 = vmatprep.mubr.f32.mxu0 0.0
    %640 = vmatmul.mubr.f32.gmra.mxu0 %v573
    %v641 = vpop.f32.mrf.mxu0
    %v642 = vadd.f32 %v570, %v641
    %v643 = vpop.f32.mrf.mxu0
    %v644 = vadd.f32 %v570, %v643
    %645 = vdwg.mxu0
    %v648 = vcombine.low %v642, %v644
    %v650 = vunpack.c.l.s4 1966171168
    %v651 = vunpack.c.0.s8 %v650
    %v652 = vlaneseq
    %v653 = vshrl.u32 %v652, 7
    %v654 = vsub.s32 %v651, %v653
    %v655 = vrot.slane %v648, %v654
    %v657 = vunpack.c.l.s4 1966171168
    %v658 = vunpack.c.0.s8 %v657
    %v659 = vlaneseq
    %v660 = vshrl.u32 %v659, 7
    %v661 = vsub.s32 %v658, %v660
    %v662 = vrot.slane %v655, %v661
    %v664 = vlaneseq
    %vm665 = vcmp.ge.s32.totalorder %v664, 0
    %vm666 = vcmp.lt.s32.totalorder %v664, 256
    %vm667 = vmand %vm665, %vm666
    %668 = vst.msk [vmem:[#allocation2] sm:$0x3] %vm667, %v662
    // Predicated region
    $region26: #{dnn_forward.1} parent=1 // pred_check
      _
    $region27: #{dnn_forward.1} parent=1 // pred_check_branch
      %670 = sbr.rel (0) target = $region29
    $region28: #{dnn_forward.1} parent=1 // pred_region
      %s672 = ssub.s32 32, 32
      %673 = vsyncadd [#allocation3], %s672
      %s675 = sshll.u32 [#allocation2], 4
      %s676 = int_to_ptr.vmem [resolvable:$true] %s675
      %678 = dma.vmem_to_hbm [thread:$0]  %s676, 32, %s6, [#allocation3]
    $region29: #{dnn_forward.1} parent=1 // pred_fallthru
      _
    // Predicated region
    $region30: #{dnn_forward.1} parent=1 // pred_check
      _
    $region31: #{dnn_forward.1} parent=1 // pred_check_branch
      %680 = sbr.rel (0) target = $region33
    $region32: #{dnn_forward.1} parent=1 // pred_region
      %681 = dma.done [#allocation3], 32
    $region33: #{dnn_forward.1} parent=1 // pred_fallthru
      _
    %682 = vsyncpa [#allocation3], 1

</llo_original>
